<compile_context>
chip_gen: v5e
topology: v5e:2x2
jax: 0.10.0
libtpu: 0.0.40
codegen_flags: <defaults>
</compile_context>

<pallas_src>
import functools

import jax
import jax.numpy as jnp
from jax.experimental import pallas as pl
from jax.experimental.pallas import tpu as pltpu


def make_saddle_forward(offset: float):
    """Returns a jitted, differentiable forward() for a fixed offset.

    Mirrors `Model(x, offset)`: offset is a construction-time constant, so it
    is baked into the kernel closure (zero extra operands at call time).
    """
    offset = float(offset)

    def saddle_kernel(param_ref, out_ref):
        # param_ref: SMEM f32[2] -> [x, y];  out_ref: SMEM f32[1]
        x = param_ref[0]
        y = param_ref[1]
        out_ref[0] = x * x - y * y + offset

    def _pallas_forward(param: jax.Array) -> jax.Array:
        param = param.astype(jnp.float32)
        out = pl.pallas_call(
            saddle_kernel,
            out_shape=jax.ShapeDtypeStruct((1,), jnp.float32),
            in_specs=[pl.BlockSpec(memory_space=pltpu.SMEM)],
            out_specs=pl.BlockSpec(memory_space=pltpu.SMEM),
        )(param)
        # Scalar extraction stays inside the jit -> fused, no extra dispatch.
        return out[0]

    @jax.custom_vjp
    def forward(param: jax.Array) -> jax.Array:
        return _pallas_forward(param)

    def forward_fwd(param):
        return _pallas_forward(param), param.astype(jnp.float32)

    def forward_bwd(param_f32, g):
        # d/dx (x^2 - y^2 + c) = 2x ; d/dy = -2y ; offset is a constant.
        grad = jnp.array([2.0, -2.0], dtype=jnp.float32) * param_f32 * g
        return (grad,)

    forward.defvjp(forward_fwd, forward_bwd)
    return jax.jit(forward)


if __name__ == "__main__":
    key = jax.random.PRNGKey(0)
    # Deterministic "parameter" init (corresponds to torch.tensor(x).float()
    # with x a pair of scalars) and a fixed construction-time offset.
    param = jax.random.normal(key, (2,), dtype=jnp.float32)
    offset = 0.5

    saddle_forward = make_saddle_forward(offset)

    # Forward pass through the Pallas kernel.
    result = saddle_forward(param)
    jax.block_until_ready(result)

    # Pure-JAX reference check (forward).
    ref = param[0] ** 2 - param[1] ** 2 + jnp.float32(offset)
    assert jnp.allclose(result, ref, atol=1e-6, rtol=1e-6), (result, ref)

    # Gradient check through the custom VJP (nn.Parameter training path).
    grad = jax.jit(jax.grad(saddle_forward))(param)
    jax.block_until_ready(grad)
    grad_ref = jnp.array([2.0 * param[0], -2.0 * param[1]], dtype=jnp.float32)
    assert jnp.allclose(grad, grad_ref, atol=1e-6, rtol=1e-6), (grad, grad_ref)

    print("KERNEL_OK")
</pallas_src>

<mosaic_0001>
module attributes {stable_mosaic.version = 11 : i64} {
  func.func @saddle_kernel(%arg0: memref<2xf32, #tpu.memory_space<smem>>, %arg1: memref<1xf32, #tpu.memory_space<smem>>) attributes {dimension_semantics = [], scalar_prefetch = 0 : i64, scratch_operands = 0 : i64, tpu.core_type = #tpu.core_type<tc>} {
    %c0 = arith.constant 0 : index
    %0 = memref.load %arg0[%c0] : memref<2xf32, #tpu.memory_space<smem>>
    %c1 = arith.constant 1 : index
    %1 = memref.load %arg0[%c1] : memref<2xf32, #tpu.memory_space<smem>>
    %2 = arith.mulf %0, %0 : f32
    %3 = arith.mulf %1, %1 : f32
    %4 = arith.subf %2, %3 : f32
    %cst = arith.constant 5.000000e-01 : f32
    %5 = arith.addf %4, %cst : f32
    %c0_0 = arith.constant 0 : index
    %6 = memref.load %arg1[%c0_0] : memref<1xf32, #tpu.memory_space<smem>>
    memref.store %5, %arg1[%c0_0] : memref<1xf32, #tpu.memory_space<smem>>
    return
  }
}

</mosaic_0001>

<llo_original>
// kernel: forward.1
$region0: #{forward.1}
  #allocation0 [shape = 'u32[]', space=smem, size = 0x4, offset = 0x4, fixed_abs, tag = 'smem constant byte address 0x4 - core index']
  #allocation1 [shape = 'u32[72,128]{1,0:T(1,128)}', space=vmem, size = 0x9000, scoped, tag = 'internal scratch']
  %s0 = inlined_call_operand.hbm [shape: f32[2], index: 0, kind: input, shape index: {}]
  %s1 = inlined_call_operand.hbm [shape: f32[1], index: 1, kind: output, shape index: {}]
  %s2 = sld [smem:[#allocation0]]
  $region18: #{forward.1} parent=0
    _
  %s4 = ssub.s32 1, %s2
  %s5 = scalar_select 0, %s4, %s2
  $region1: #{forward.1} parent=0
    #allocation2 [shape = 'u8[512]{0}', space=smem, size = 0x200, scoped, tag = 'input window, operand 0, single buffered']
    #allocation3 [shape = 's32[1]{0}', space=sflag, size = 0x4, scoped, tag = 'scoped memory for forward.1']
    #allocation4 [shape = 's32[1]{0}', space=sflag, size = 0x4, scoped, tag = 'scoped memory for forward.1']
    #allocation5 [shape = 'u8[512]{0}', space=smem, size = 0x200, scoped, tag = 'output window, operand 0, single buffered']
    %6 = vsyncpa [#allocation3], 0
    %7 = vsyncpa [#allocation4], 0
    // Predicated region
    $region2: #{forward.1} parent=1 // pred_check
      _
    $region3: #{forward.1} parent=1 // pred_check_branch
      %9 = sbr.rel (0) target = $region5
    $region4: #{forward.1} parent=1 // pred_region
      %11 = vsyncadd [#allocation3], 0
      %s13 = sshll.u32 %s0, 4
      %s14 = int_to_ptr.hbm [resolvable:$true] %s13
      %16 = dma.hbm_to_smem %s14, 16, [#allocation2], [#allocation3]
    $region5: #{forward.1} parent=1 // pred_fallthru
      _
    // Predicated region
    $region6: #{forward.1} parent=1 // pred_check
      _
    $region7: #{forward.1} parent=1 // pred_check_branch
      %18 = sbr.rel (0) target = $region9
    $region8: #{forward.1} parent=1 // pred_region
      %20 = dma.done [#allocation3], 16
    $region9: #{forward.1} parent=1 // pred_fallthru
      _
    %21 = sfence
    %s22 = sld [smem:[#allocation2]]
    %s23 = sld [smem:[#allocation2 + $0x1]]
    %s24 = smul.f32 %s22, %s22
    %s25 = smul.f32 %s23, %s23
    %s26 = ssub.f32 %s24, %s25
    %s27 = sadd.f32 %s26, 0.5
    %s28 = scalar_lea.smem [#allocation5], 0
    %29 = sst [smem:[%s28]] %s27
    // Predicated region
    $region10: #{forward.1} parent=1 // pred_check
      _
    $region11: #{forward.1} parent=1 // pred_check_branch
      %31 = sbr.rel (0) target = $region13
    $region12: #{forward.1} parent=1 // pred_region
      %33 = vsyncadd [#allocation4], 0
      %s35 = sshll.u32 %s1, 4
      %s36 = int_to_ptr.hbm [resolvable:$true] %s35
      %38 = dma.smem_to_hbm [#allocation5], 16, %s36, [#allocation4]
    $region13: #{forward.1} parent=1 // pred_fallthru
      _
    // Predicated region
    $region14: #{forward.1} parent=1 // pred_check
      _
    $region15: #{forward.1} parent=1 // pred_check_branch
      %40 = sbr.rel (0) target = $region17
    $region16: #{forward.1} parent=1 // pred_region
      %42 = dma.done [#allocation4], 16
    $region17: #{forward.1} parent=1 // pred_fallthru
      _
    %43 = sfence
    %44 = vsyncpa [#allocation3], 1
    %45 = vsyncpa [#allocation4], 1

</llo_original>
